<compile_context>
chip_gen: v7x
topology: tpu7x:2x2x1
jax: 0.10.0
libtpu: 0.0.40
codegen_flags: <defaults>
</compile_context>

<pallas_src>
import functools

import jax
import jax.numpy as jnp
from jax.experimental import pallas as pl
from jax.experimental.pallas import tpu as pltpu

EPS = 1e-5
NEG = -1e30          # bias for padded class lanes -> ignored by log_softmax
LANE = 128

H1, H2 = 500, 12     # real hidden widths of the PyTorch module
H1_PAD = 512         # 500 -> 512 (lane multiple)
H2_PAD = 128         # 12  -> 128 (lane multiple)


def _round_up(n, m):
    return ((n + m - 1) // m) * m


def bnnn_kernel(x_ref,
                w1_ref, g1_ref, be1_ref,
                w2_ref, g2_ref, be2_ref,
                w3_ref, b3_ref,
                out_ref):
    x = x_ref[...]                       # (B, IN)
    inv_b = 1.0 / x.shape[0]

    def bn_relu6(h, gamma, beta):
        # BatchNorm1d training semantics (biased batch stats), one-pass moments,
        # affine folded into a single per-feature scale/shift at (1,F) width.
        mean = jnp.sum(h, axis=0, keepdims=True) * inv_b          # (1, F)
        ex2 = jnp.sum(h * h, axis=0, keepdims=True) * inv_b       # (1, F)
        var = jnp.maximum(ex2 - mean * mean, 0.0)
        scale = gamma * jax.lax.rsqrt(var + EPS)                  # (1, F)
        shift = beta - mean * scale                               # (1, F)
        h = h * scale + shift                                     # (B, F) FMA
        return jnp.minimum(jnp.maximum(h, 0.0), 6.0)              # relu6

    # linear1 (bias cancelled by BN) -> bn1 -> relu6
    h1 = jnp.dot(x, w1_ref[...], preferred_element_type=jnp.float32)
    h1 = bn_relu6(h1, g1_ref[...], be1_ref[...])

    # linear2 (bias cancelled by BN) -> bn2 -> relu6
    h2 = jnp.dot(h1, w2_ref[...], preferred_element_type=jnp.float32)
    h2 = bn_relu6(h2, g2_ref[...], be2_ref[...])

    # linear3 -> log_softmax over the (padded) class axis; padded lanes hold a
    # -1e30 bias so they contribute nothing to max / sum.
    logits = jnp.dot(h2, w3_ref[...], preferred_element_type=jnp.float32) + b3_ref[...]
    m = jnp.max(logits, axis=1, keepdims=True)
    shifted = logits - m
    lse = jnp.log(jnp.sum(jnp.exp(shifted), axis=1, keepdims=True))
    out_ref[...] = shifted - lse


def pad_params(params, out_dim):
    """Pad raw (in,out)-layout params to lane-dense shapes. Drops b1/b2 (they
    are mathematically cancelled by BatchNorm's mean subtraction)."""
    w1, b1, g1, be1, w2, b2, g2, be2, w3, b3 = params
    del b1, b2
    out_pad = _round_up(max(out_dim, LANE), LANE)

    def pad2(a, rows, cols, fill=0.0):
        return jnp.pad(a, ((0, rows - a.shape[0]), (0, cols - a.shape[1])),
                       constant_values=fill)

    w1p = pad2(w1, w1.shape[0], H1_PAD)
    g1p = pad2(g1, 1, H1_PAD)            # gamma pad = 0 -> scale 0 in dead lanes
    be1p = pad2(be1, 1, H1_PAD)
    w2p = pad2(w2, H1_PAD, H2_PAD)
    g2p = pad2(g2, 1, H2_PAD)
    be2p = pad2(be2, 1, H2_PAD)
    w3p = pad2(w3, H2_PAD, out_pad)
    b3p = pad2(b3, 1, out_pad, fill=NEG)  # padded classes get -1e30 logits
    return (w1p, g1p, be1p, w2p, g2p, be2p, w3p, b3p)


@functools.partial(jax.jit, static_argnums=(2,))
def bnnn_forward_grouped(x_groups, padded_params, out_dim):
    """x_groups: (G, B, IN). Each group is one independent PyTorch batch
    (BatchNorm stats are computed per group, matching the module's forward)."""
    w1, g1, be1, w2, g2, be2, w3, b3 = padded_params
    G, B, IN = x_groups.shape
    out_pad = w3.shape[1]

    def resident(a):
        # Constant index_map -> parameter stays in VMEM across all grid steps.
        return pl.BlockSpec(a.shape, lambda g, nd=a.ndim: (0,) * nd)

    out = pl.pallas_call(
        bnnn_kernel,
        out_shape=jax.ShapeDtypeStruct((G, B, out_pad), jnp.float32),
        grid=(G,),
        in_specs=[pl.BlockSpec((None, B, IN), lambda g: (g, 0, 0))]
                 + [resident(a) for a in (w1, g1, be1, w2, g2, be2, w3, b3)],
        out_specs=pl.BlockSpec((None, B, out_pad), lambda g: (g, 0, 0)),
        compiler_params=pltpu.CompilerParams(
            dimension_semantics=("parallel",)),   # v7x: shard groups over 2 TCs
    )(x_groups, w1, g1, be1, w2, g2, be2, w3, b3)
    return out[..., :out_dim]


def bnnn_forward(x, padded_params, out_dim):
    """Single-batch convenience wrapper: x is (B, IN)."""
    return bnnn_forward_grouped(x[None], padded_params, out_dim)[0]


def init_params(key, input_layer, output_layer):
    """Deterministic synthetic parameters (PyTorch-Linear-style uniform init),
    stored in (in_features, out_features) layout."""
    ks = jax.random.split(key, 6)

    def linear(kw, kb, fan_in, fan_out):
        bound = 1.0 / jnp.sqrt(fan_in)
        w = jax.random.uniform(kw, (fan_in, fan_out), jnp.float32, -bound, bound)
        b = jax.random.uniform(kb, (1, fan_out), jnp.float32, -bound, bound)
        return w, b

    w1, b1 = linear(ks[0], ks[1], input_layer, H1)
    w2, b2 = linear(ks[2], ks[3], H1, H2)
    w3, b3 = linear(ks[4], ks[5], H2, output_layer)

    g1, be1 = jnp.ones((1, H1), jnp.float32), jnp.zeros((1, H1), jnp.float32)
    g2, be2 = jnp.ones((1, H2), jnp.float32), jnp.zeros((1, H2), jnp.float32)
    return (w1, b1, g1, be1, w2, b2, g2, be2, w3, b3)


def bnnn_reference(x, params):
    """Pure-JAX reference of the original module forward (with biases)."""
    w1, b1, g1, be1, w2, b2, g2, be2, w3, b3 = params

    def bn(h, gamma, beta):
        mean = jnp.mean(h, axis=0, keepdims=True)
        var = jnp.mean((h - mean) ** 2, axis=0, keepdims=True)
        return (h - mean) * jax.lax.rsqrt(var + EPS) * gamma + beta

    relu6 = lambda h: jnp.clip(h, 0.0, 6.0)
    h1 = relu6(bn(x @ w1 + b1, g1, be1))
    h2 = relu6(bn(h1 @ w2 + b2, g2, be2))
    logits = h2 @ w3 + b3
    return jax.nn.log_softmax(logits, axis=1)


if __name__ == "__main__":
    input_layer = 32
    output_layer = 10
    batch = 8
    groups = 4   # G independent PyTorch batches processed in one pallas_call

    key = jax.random.PRNGKey(0)
    kx, kp = jax.random.split(key)
    x = jax.random.normal(kx, (groups, batch, input_layer), jnp.float32)

    params = init_params(kp, input_layer, output_layer)
    padded = pad_params(params, output_layer)

    out = bnnn_forward_grouped(x, padded, output_layer)
    jax.block_until_ready(out)

    assert out.shape == (groups, batch, output_layer)
    assert bool(jnp.all(jnp.isfinite(out)))
    # log_softmax rows must exponentiate-sum to ~1
    assert bool(jnp.allclose(jnp.sum(jnp.exp(out), axis=-1), 1.0, atol=1e-5))

    # Cross-check against the unpadded, bias-including pure-JAX reference.
    ref = jnp.stack([bnnn_reference(x[g], params) for g in range(groups)])
    assert bool(jnp.allclose(out, ref, atol=1e-3, rtol=1e-3))

    print("KERNEL_OK")
</pallas_src>

<mosaic_0001>
module attributes {stable_mosaic.version = 11 : i64} {
  func.func @bnnn_kernel(%arg0: i32, %arg1: memref<1x8x32xf32, #tpu.memory_space<vmem>>, %arg2: memref<32x512xf32, #tpu.memory_space<vmem>>, %arg3: memref<1x512xf32, #tpu.memory_space<vmem>>, %arg4: memref<1x512xf32, #tpu.memory_space<vmem>>, %arg5: memref<512x128xf32, #tpu.memory_space<vmem>>, %arg6: memref<1x128xf32, #tpu.memory_space<vmem>>, %arg7: memref<1x128xf32, #tpu.memory_space<vmem>>, %arg8: memref<128x128xf32, #tpu.memory_space<vmem>>, %arg9: memref<1x128xf32, #tpu.memory_space<vmem>>, %arg10: memref<1x8x128xf32, #tpu.memory_space<vmem>>) attributes {dimension_semantics = [#tpu.dimension_semantics<parallel>], iteration_bounds = array<i64: 4>, scalar_prefetch = 0 : i64, scratch_operands = 0 : i64, tpu.core_type = #tpu.core_type<tc>, window_params = [{transform_indices = @transform_0, window_bounds = array<i64: 1, 8, 32>}, {pipeline_mode = #tpu.pipeline_mode<synchronous>, transform_indices = @transform_1, window_bounds = array<i64: 32, 512>}, {pipeline_mode = #tpu.pipeline_mode<synchronous>, transform_indices = @transform_2, window_bounds = array<i64: 1, 512>}, {pipeline_mode = #tpu.pipeline_mode<synchronous>, transform_indices = @transform_3, window_bounds = array<i64: 1, 512>}, {pipeline_mode = #tpu.pipeline_mode<synchronous>, transform_indices = @transform_4, window_bounds = array<i64: 512, 128>}, {pipeline_mode = #tpu.pipeline_mode<synchronous>, transform_indices = @transform_5, window_bounds = array<i64: 1, 128>}, {pipeline_mode = #tpu.pipeline_mode<synchronous>, transform_indices = @transform_6, window_bounds = array<i64: 1, 128>}, {pipeline_mode = #tpu.pipeline_mode<synchronous>, transform_indices = @transform_7, window_bounds = array<i64: 128, 128>}, {pipeline_mode = #tpu.pipeline_mode<synchronous>, transform_indices = @transform_8, window_bounds = array<i64: 1, 128>}, {transform_indices = @transform_9, window_bounds = array<i64: 1, 8, 128>}]} {
    %c0 = arith.constant 0 : index
    %c0_0 = arith.constant 0 : index
    %c0_1 = arith.constant 0 : index
    %0 = vector.load %arg1[%c0, %c0_0, %c0_1] : memref<1x8x32xf32, #tpu.memory_space<vmem>>, vector<1x8x32xf32>
    %1 = vector.shape_cast %0 : vector<1x8x32xf32> to vector<8x32xf32>
    %c0_2 = arith.constant 0 : index
    %c0_3 = arith.constant 0 : index
    %2 = vector.load %arg2[%c0_2, %c0_3] : memref<32x512xf32, #tpu.memory_space<vmem>>, vector<32x512xf32>
    %cst = arith.constant dense<0.000000e+00> : vector<8x512xf32>
    %3 = tpu.matmul %1, %2, %cst {dimension_numbers = #tpu.dot_dimension_numbers<[1], [0], [0], [1], [0, 0, 1, 1], [], []>} : vector<8x32xf32>, vector<32x512xf32>, vector<8x512xf32> -> vector<8x512xf32>
    %c0_4 = arith.constant 0 : index
    %c0_5 = arith.constant 0 : index
    %4 = vector.load %arg3[%c0_4, %c0_5] : memref<1x512xf32, #tpu.memory_space<vmem>>, vector<1x512xf32>
    %c0_6 = arith.constant 0 : index
    %c0_7 = arith.constant 0 : index
    %5 = vector.load %arg4[%c0_6, %c0_7] : memref<1x512xf32, #tpu.memory_space<vmem>>, vector<1x512xf32>
    %cst_8 = arith.constant dense<0.000000e+00> : vector<512xf32>
    %6 = vector.multi_reduction <add>, %3, %cst_8 [0] : vector<8x512xf32> to vector<512xf32>
    %7 = vector.shape_cast %6 : vector<512xf32> to vector<1x512xf32>
    %cst_9 = arith.constant 1.250000e-01 : f32
    %8 = vector.broadcast %cst_9 : f32 to vector<1x512xf32>
    %9 = arith.mulf %7, %8 : vector<1x512xf32>
    %10 = arith.mulf %3, %3 : vector<8x512xf32>
    %cst_10 = arith.constant dense<0.000000e+00> : vector<512xf32>
    %11 = vector.multi_reduction <add>, %10, %cst_10 [0] : vector<8x512xf32> to vector<512xf32>
    %12 = vector.shape_cast %11 : vector<512xf32> to vector<1x512xf32>
    %cst_11 = arith.constant 1.250000e-01 : f32
    %13 = vector.broadcast %cst_11 : f32 to vector<1x512xf32>
    %14 = arith.mulf %12, %13 : vector<1x512xf32>
    %15 = arith.mulf %9, %9 : vector<1x512xf32>
    %16 = arith.subf %14, %15 : vector<1x512xf32>
    %cst_12 = arith.constant 0.000000e+00 : f32
    %17 = vector.broadcast %cst_12 : f32 to vector<1x512xf32>
    %18 = arith.maximumf %16, %17 : vector<1x512xf32>
    %cst_13 = arith.constant 9.99999974E-6 : f32
    %19 = vector.broadcast %cst_13 : f32 to vector<1x512xf32>
    %20 = arith.addf %18, %19 : vector<1x512xf32>
    %21 = math.rsqrt %20 : vector<1x512xf32>
    %22 = arith.mulf %4, %21 : vector<1x512xf32>
    %23 = arith.mulf %9, %22 : vector<1x512xf32>
    %24 = arith.subf %5, %23 : vector<1x512xf32>
    %25 = vector.broadcast %22 : vector<1x512xf32> to vector<8x512xf32>
    %26 = arith.mulf %3, %25 : vector<8x512xf32>
    %27 = vector.broadcast %24 : vector<1x512xf32> to vector<8x512xf32>
    %28 = arith.addf %26, %27 : vector<8x512xf32>
    %cst_14 = arith.constant 0.000000e+00 : f32
    %29 = vector.broadcast %cst_14 : f32 to vector<8x512xf32>
    %30 = arith.maximumf %28, %29 : vector<8x512xf32>
    %cst_15 = arith.constant 6.000000e+00 : f32
    %31 = vector.broadcast %cst_15 : f32 to vector<8x512xf32>
    %32 = arith.minimumf %30, %31 : vector<8x512xf32>
    %c0_16 = arith.constant 0 : index
    %c0_17 = arith.constant 0 : index
    %33 = vector.load %arg5[%c0_16, %c0_17] : memref<512x128xf32, #tpu.memory_space<vmem>>, vector<512x128xf32>
    %cst_18 = arith.constant dense<0.000000e+00> : vector<8x128xf32>
    %34 = tpu.matmul %32, %33, %cst_18 {dimension_numbers = #tpu.dot_dimension_numbers<[1], [0], [0], [1], [0, 0, 1, 1], [], []>} : vector<8x512xf32>, vector<512x128xf32>, vector<8x128xf32> -> vector<8x128xf32>
    %c0_19 = arith.constant 0 : index
    %c0_20 = arith.constant 0 : index
    %35 = vector.load %arg6[%c0_19, %c0_20] : memref<1x128xf32, #tpu.memory_space<vmem>>, vector<1x128xf32>
    %c0_21 = arith.constant 0 : index
    %c0_22 = arith.constant 0 : index
    %36 = vector.load %arg7[%c0_21, %c0_22] : memref<1x128xf32, #tpu.memory_space<vmem>>, vector<1x128xf32>
    %cst_23 = arith.constant dense<0.000000e+00> : vector<128xf32>
    %37 = vector.multi_reduction <add>, %34, %cst_23 [0] : vector<8x128xf32> to vector<128xf32>
    %38 = vector.shape_cast %37 : vector<128xf32> to vector<1x128xf32>
    %cst_24 = arith.constant 1.250000e-01 : f32
    %39 = vector.broadcast %cst_24 : f32 to vector<1x128xf32>
    %40 = arith.mulf %38, %39 : vector<1x128xf32>
    %41 = arith.mulf %34, %34 : vector<8x128xf32>
    %cst_25 = arith.constant dense<0.000000e+00> : vector<128xf32>
    %42 = vector.multi_reduction <add>, %41, %cst_25 [0] : vector<8x128xf32> to vector<128xf32>
    %43 = vector.shape_cast %42 : vector<128xf32> to vector<1x128xf32>
    %cst_26 = arith.constant 1.250000e-01 : f32
    %44 = vector.broadcast %cst_26 : f32 to vector<1x128xf32>
    %45 = arith.mulf %43, %44 : vector<1x128xf32>
    %46 = arith.mulf %40, %40 : vector<1x128xf32>
    %47 = arith.subf %45, %46 : vector<1x128xf32>
    %cst_27 = arith.constant 0.000000e+00 : f32
    %48 = vector.broadcast %cst_27 : f32 to vector<1x128xf32>
    %49 = arith.maximumf %47, %48 : vector<1x128xf32>
    %cst_28 = arith.constant 9.99999974E-6 : f32
    %50 = vector.broadcast %cst_28 : f32 to vector<1x128xf32>
    %51 = arith.addf %49, %50 : vector<1x128xf32>
    %52 = math.rsqrt %51 : vector<1x128xf32>
    %53 = arith.mulf %35, %52 : vector<1x128xf32>
    %54 = arith.mulf %40, %53 : vector<1x128xf32>
    %55 = arith.subf %36, %54 : vector<1x128xf32>
    %56 = vector.broadcast %53 : vector<1x128xf32> to vector<8x128xf32>
    %57 = arith.mulf %34, %56 : vector<8x128xf32>
    %58 = vector.broadcast %55 : vector<1x128xf32> to vector<8x128xf32>
    %59 = arith.addf %57, %58 : vector<8x128xf32>
    %cst_29 = arith.constant 0.000000e+00 : f32
    %60 = vector.broadcast %cst_29 : f32 to vector<8x128xf32>
    %61 = arith.maximumf %59, %60 : vector<8x128xf32>
    %cst_30 = arith.constant 6.000000e+00 : f32
    %62 = vector.broadcast %cst_30 : f32 to vector<8x128xf32>
    %63 = arith.minimumf %61, %62 : vector<8x128xf32>
    %c0_31 = arith.constant 0 : index
    %c0_32 = arith.constant 0 : index
    %64 = vector.load %arg8[%c0_31, %c0_32] : memref<128x128xf32, #tpu.memory_space<vmem>>, vector<128x128xf32>
    %cst_33 = arith.constant dense<0.000000e+00> : vector<8x128xf32>
    %65 = tpu.matmul %63, %64, %cst_33 {dimension_numbers = #tpu.dot_dimension_numbers<[1], [0], [0], [1], [0, 0, 1, 1], [], []>} : vector<8x128xf32>, vector<128x128xf32>, vector<8x128xf32> -> vector<8x128xf32>
    %c0_34 = arith.constant 0 : index
    %c0_35 = arith.constant 0 : index
    %66 = vector.load %arg9[%c0_34, %c0_35] : memref<1x128xf32, #tpu.memory_space<vmem>>, vector<1x128xf32>
    %67 = vector.broadcast %66 : vector<1x128xf32> to vector<8x128xf32>
    %68 = arith.addf %65, %67 : vector<8x128xf32>
    %cst_36 = arith.constant dense<0xFF800000> : vector<8xf32>
    %69 = vector.multi_reduction <maximumf>, %68, %cst_36 [1] : vector<8x128xf32> to vector<8xf32>
    %70 = vector.shape_cast %69 : vector<8xf32> to vector<8x1xf32>
    %71 = vector.broadcast %70 : vector<8x1xf32> to vector<8x128xf32>
    %72 = arith.subf %68, %71 : vector<8x128xf32>
    %73 = math.exp %72 : vector<8x128xf32>
    %cst_37 = arith.constant dense<0.000000e+00> : vector<8xf32>
    %74 = vector.multi_reduction <add>, %73, %cst_37 [1] : vector<8x128xf32> to vector<8xf32>
    %75 = vector.shape_cast %74 : vector<8xf32> to vector<8x1xf32>
    %76 = math.log %75 : vector<8x1xf32>
    %77 = vector.broadcast %76 : vector<8x1xf32> to vector<8x128xf32>
    %78 = arith.subf %72, %77 : vector<8x128xf32>
    %c0_38 = arith.constant 0 : index
    %c0_39 = arith.constant 0 : index
    %c0_40 = arith.constant 0 : index
    %79 = vector.load %arg10[%c0_38, %c0_39, %c0_40] : memref<1x8x128xf32, #tpu.memory_space<vmem>>, vector<1x8x128xf32>
    %80 = vector.shape_cast %79 : vector<1x8x128xf32> to vector<8x128xf32>
    %81 = vector.shape_cast %78 : vector<8x128xf32> to vector<1x8x128xf32>
    tpu.vector_store %arg10[%c0_38, %c0_39, %c0_40], %81 {strides = array<i32>} : memref<1x8x128xf32, #tpu.memory_space<vmem>>, vector<1x8x128xf32>,
    return
  }
  func.func @transform_0(%arg0: i32) -> (i32, i32, i32) {
    %c0_i32 = arith.constant 0 : i32
    %c0_i32_0 = arith.constant 0 : i32
    %c0_i32_1 = arith.constant 0 : i32
    return %arg0, %c0_i32, %c0_i32_0 : i32, i32, i32
  }
  func.func @transform_1(%arg0: i32) -> (i32, i32) {
    %c0_i32 = arith.constant 0 : i32
    %c0_i32_0 = arith.constant 0 : i32
    %c0_i32_1 = arith.constant 0 : i32
    return %c0_i32, %c0_i32_0 : i32, i32
  }
  func.func @transform_2(%arg0: i32) -> (i32, i32) {
    %c0_i32 = arith.constant 0 : i32
    %c0_i32_0 = arith.constant 0 : i32
    %c0_i32_1 = arith.constant 0 : i32
    return %c0_i32, %c0_i32_0 : i32, i32
  }
  func.func @transform_3(%arg0: i32) -> (i32, i32) {
    %c0_i32 = arith.constant 0 : i32
    %c0_i32_0 = arith.constant 0 : i32
    %c0_i32_1 = arith.constant 0 : i32
    return %c0_i32, %c0_i32_0 : i32, i32
  }
  func.func @transform_4(%arg0: i32) -> (i32, i32) {
    %c0_i32 = arith.constant 0 : i32
    %c0_i32_0 = arith.constant 0 : i32
    %c0_i32_1 = arith.constant 0 : i32
    return %c0_i32, %c0_i32_0 : i32, i32
  }
  func.func @transform_5(%arg0: i32) -> (i32, i32) {
    %c0_i32 = arith.constant 0 : i32
    %c0_i32_0 = arith.constant 0 : i32
    %c0_i32_1 = arith.constant 0 : i32
    return %c0_i32, %c0_i32_0 : i32, i32
  }
  func.func @transform_6(%arg0: i32) -> (i32, i32) {
    %c0_i32 = arith.constant 0 : i32
    %c0_i32_0 = arith.constant 0 : i32
    %c0_i32_1 = arith.constant 0 : i32
    return %c0_i32, %c0_i32_0 : i32, i32
  }
  func.func @transform_7(%arg0: i32) -> (i32, i32) {
    %c0_i32 = arith.constant 0 : i32
    %c0_i32_0 = arith.constant 0 : i32
    %c0_i32_1 = arith.constant 0 : i32
    return %c0_i32, %c0_i32_0 : i32, i32
  }
  func.func @transform_8(%arg0: i32) -> (i32, i32) {
    %c0_i32 = arith.constant 0 : i32
    %c0_i32_0 = arith.constant 0 : i32
    %c0_i32_1 = arith.constant 0 : i32
    return %c0_i32, %c0_i32_0 : i32, i32
  }
  func.func @transform_9(%arg0: i32) -> (i32, i32, i32) {
    %c0_i32 = arith.constant 0 : i32
    %c0_i32_0 = arith.constant 0 : i32
    %c0_i32_1 = arith.constant 0 : i32
    return %arg0, %c0_i32, %c0_i32_0 : i32, i32, i32
  }
}

</mosaic_0001>

<llo_original>
// kernel: bnnn_forward_grouped.1
$region0: #{bnnn_forward_grouped.1}
  #allocation0 [shape = 'u32[]', space=smem, size = 0x4, offset = 0x4, fixed_abs, tag = 'smem constant byte address 0x4 - core index']
  #allocation1 [shape = 'u32[144,128]{1,0:T(1,128)}', space=vmem, size = 0x12000, scoped, tag = 'internal scratch']
  %s0 = inlined_call_operand.hbm [shape: f32[4,8,32], index: 0, kind: input, shape index: {}]
  %s1 = inlined_call_operand.hbm [shape: f32[32,512], index: 1, kind: input, shape index: {}]
  %s2 = inlined_call_operand.vmem [shape: f32[1,512], index: 2, kind: input, shape index: {}]
  %s3 = inlined_call_operand.vmem [shape: f32[1,512], index: 3, kind: input, shape index: {}]
  %s4 = inlined_call_operand.hbm [shape: f32[512,128], index: 4, kind: input, shape index: {}]
  %s5 = inlined_call_operand.vmem [shape: f32[1,128], index: 5, kind: input, shape index: {}]
  %s6 = inlined_call_operand.vmem [shape: f32[1,128], index: 6, kind: input, shape index: {}]
  %s7 = inlined_call_operand.hbm [shape: f32[128,128], index: 7, kind: input, shape index: {}]
  %s8 = inlined_call_operand.vmem [shape: f32[1,128], index: 8, kind: input, shape index: {}]
  %s9 = inlined_call_operand.hbm [shape: f32[4,8,128], index: 9, kind: output, shape index: {}]
  %s10 = sld [smem:[#allocation0]]
  $region85: #{bnnn_forward_grouped.1} parent=0
    _
  %s12 = ssub.s32 1, %s10
  %s13 = scalar_select 0, %s12, %s10
  $region1: #{bnnn_forward_grouped.1} parent=0
    #allocation2 [shape = 'u8[8192]{0}', space=vmem, size = 0x2000, scoped, tag = 'input window, operand 0']
    #allocation3 [shape = 's32[2]{0}', space=sflag, size = 0x8, scoped, tag = 'scoped memory for bnnn_forward_grouped.1']
    #allocation4 [shape = 's32[2]{0}', space=sflag, size = 0x8, scoped, tag = 'scoped memory for bnnn_forward_grouped.1']
    #allocation5 [shape = 'u8[65536]{0}', space=vmem, size = 0x10000, scoped, tag = 'input window, operand 1, single buffered']
    #allocation6 [shape = 's32[1]{0}', space=sflag, size = 0x4, scoped, tag = 'scoped memory for bnnn_forward_grouped.1']
    #allocation7 [shape = 'u8[262144]{0}', space=vmem, size = 0x40000, scoped, tag = 'input window, operand 4, single buffered']
    #allocation8 [shape = 'u8[65536]{0}', space=vmem, size = 0x10000, scoped, tag = 'input window, operand 7, single buffered']
    #allocation9 [shape = 's32[1]{0}', space=sflag, size = 0x4, scoped, tag = 'scoped memory for bnnn_forward_grouped.1']
    #allocation10 [shape = 'u8[8192]{0}', space=vmem, size = 0x2000, scoped, tag = 'output window, operand 0']
    %14 = vsyncpa [#allocation3], 0
    %s15 = scalar_lea.sflag [#allocation3], 1
    %16 = vsyncpa %s15, 0
    %17 = vsyncpa [#allocation6], 0
    %18 = vsyncpa [#allocation9], 0
    %19 = vsyncpa [#allocation4], 0
    %s20 = scalar_lea.sflag [#allocation4], 1
    %21 = vsyncpa %s20, 0
    loop: start=0, step=1, limit=6
    $region2: #{bnnn_forward_grouped.1} parent=1 // loop_pre_header
      _
    $region3: #{bnnn_forward_grouped.1} parent=1 // loop_header
      %s23 = sphi 0, %s27
      %p24 = scmp.ge.s32.totalorder %s23, 6
      %s33 = sphi 0, %s35
      %s36 = sphi 0, %s33
      %s37 = sphi 0, %s36
      %s53 = sphi 0, %s37
      %s57 = sphi 0, %s57
      %s59 = sphi 0, %s57
      %s60 = sphi 0, %s59
      %s74 = sphi 0, %s60
      %s78 = sphi 0, %s78
      %s80 = sphi 0, %s78
      %s81 = sphi 0, %s80
      %s95 = sphi 0, %s81
      %s99 = sphi 0, %s99
      %s101 = sphi 0, %s99
      %s102 = sphi 0, %s101
      %s116 = sphi 0, %s102
      %s120 = sphi 0, %s120
      %s122 = sphi 0, %s120
      %s123 = sphi 0, %s122
      %s137 = sphi 0, %s123
      %s141 = sphi 0, %s141
      %s143 = sphi 0, %s141
      %s144 = sphi 0, %s143
      %s158 = sphi 0, %s144
      %s162 = sphi 0, %s162
      %s164 = sphi 0, %s162
      %s165 = sphi 0, %s164
      %s179 = sphi 0, %s165
      %s183 = sphi 0, %s183
      %s185 = sphi 0, %s183
      %s186 = sphi 0, %s185
      %s200 = sphi 0, %s186
      %s204 = sphi 0, %s204
      %s206 = sphi 0, %s204
      %s207 = sphi 0, %s206
      %s221 = sphi 0, %s207
      %s227 = sphi 0, %s229
      %s230 = sphi 0, %s227
      %s231 = sphi 0, %s230
      %s247 = sphi 0, %s231
    $region4: #{bnnn_forward_grouped.1} parent=1 // loop_header_branch
      %26 = sbr.rel (%p24) target = $region8
    $region5: #{bnnn_forward_grouped.1} parent=1 // loop_body
      %s28 = ssub.s32 %s23, 1
      %s29 = ssub.s32 %s23, 2
      %s30 = sadd.s32 %s23, 1
      %s31 = ssub.s32 %s23, %s30
      %p32 = scmp.eq.s32.totalorder %s31, 0
      %s34 = sadd.s32 %s33, 1
      %s35 = scalar_select %p32, %s33, %s34
      %p38 = pneg %p32
      %p39 = scmp.eq.s32.totalorder %s23, 3
      %p40 = por %p38, %p39
      %p41 = scmp.ne.s32.totalorder %s33, %s36
      %p42 = scmp.eq.s32.totalorder %s23, 0
      %p43 = por %p41, %p42
      %p44 = scmp.ne.s32.totalorder %s33, %s36
      %p45 = scmp.eq.s32.totalorder %s28, 3
      %p46 = por %p44, %p45
      %p47 = scmp.ne.s32.totalorder %s36, %s37
      %p48 = scmp.eq.s32.totalorder %s28, 0
      %p49 = por %p47, %p48
      %p50 = scmp.ne.s32.totalorder %s36, %s37
      %p51 = scmp.eq.s32.totalorder %s29, 3
      %p52 = por %p50, %p51
      %p54 = scmp.ne.s32.totalorder %s37, %s53
      %p55 = scmp.eq.s32.totalorder %s29, 0
      %p56 = por %p54, %p55
      %s58 = sadd.s32 %s57, 1
      %p61 = scmp.eq.s32.totalorder %s23, 3
      %p62 = scmp.ne.s32.totalorder %s57, %s59
      %p63 = scmp.eq.s32.totalorder %s23, 0
      %p64 = por %p62, %p63
      %p65 = scmp.ne.s32.totalorder %s57, %s59
      %p66 = scmp.eq.s32.totalorder %s28, 3
      %p67 = por %p65, %p66
      %p68 = scmp.ne.s32.totalorder %s59, %s60
      %p69 = scmp.eq.s32.totalorder %s28, 0
      %p70 = por %p68, %p69
      %p71 = scmp.ne.s32.totalorder %s59, %s60
      %p72 = scmp.eq.s32.totalorder %s29, 3
      %p73 = por %p71, %p72
      %p75 = scmp.ne.s32.totalorder %s60, %s74
      %p76 = scmp.eq.s32.totalorder %s29, 0
      %p77 = por %p75, %p76
      %s79 = sadd.s32 %s78, 1
      %p82 = scmp.eq.s32.totalorder %s23, 3
      %p83 = scmp.ne.s32.totalorder %s78, %s80
      %p84 = scmp.eq.s32.totalorder %s23, 0
      %p85 = por %p83, %p84
      %p86 = scmp.ne.s32.totalorder %s78, %s80
      %p87 = scmp.eq.s32.totalorder %s28, 3
      %p88 = por %p86, %p87
      %p89 = scmp.ne.s32.totalorder %s80, %s81
      %p90 = scmp.eq.s32.totalorder %s28, 0
      %p91 = por %p89, %p90
      %p92 = scmp.ne.s32.totalorder %s80, %s81
      %p93 = scmp.eq.s32.totalorder %s29, 3
      %p94 = por %p92, %p93
      %p96 = scmp.ne.s32.totalorder %s81, %s95
      %p97 = scmp.eq.s32.totalorder %s29, 0
      %p98 = por %p96, %p97
      %s100 = sadd.s32 %s99, 1
      %p103 = scmp.eq.s32.totalorder %s23, 3
      %p104 = scmp.ne.s32.totalorder %s99, %s101
      %p105 = scmp.eq.s32.totalorder %s23, 0
      %p106 = por %p104, %p105
      %p107 = scmp.ne.s32.totalorder %s99, %s101
      %p108 = scmp.eq.s32.totalorder %s28, 3
      %p109 = por %p107, %p108
      %p110 = scmp.ne.s32.totalorder %s101, %s102
      %p111 = scmp.eq.s32.totalorder %s28, 0
      %p112 = por %p110, %p111
      %p113 = scmp.ne.s32.totalorder %s101, %s102
      %p114 = scmp.eq.s32.totalorder %s29, 3
      %p115 = por %p113, %p114
      %p117 = scmp.ne.s32.totalorder %s102, %s116
      %p118 = scmp.eq.s32.totalorder %s29, 0
      %p119 = por %p117, %p118
      %s121 = sadd.s32 %s120, 1
      %p124 = scmp.eq.s32.totalorder %s23, 3
      %p125 = scmp.ne.s32.totalorder %s120, %s122
      %p126 = scmp.eq.s32.totalorder %s23, 0
      %p127 = por %p125, %p126
      %p128 = scmp.ne.s32.totalorder %s120, %s122
      %p129 = scmp.eq.s32.totalorder %s28, 3
      %p130 = por %p128, %p129
      %p131 = scmp.ne.s32.totalorder %s122, %s123
      %p132 = scmp.eq.s32.totalorder %s28, 0
      %p133 = por %p131, %p132
      %p134 = scmp.ne.s32.totalorder %s122, %s123
      %p135 = scmp.eq.s32.totalorder %s29, 3
      %p136 = por %p134, %p135
      %p138 = scmp.ne.s32.totalorder %s123, %s137
      %p139 = scmp.eq.s32.totalorder %s29, 0
      %p140 = por %p138, %p139
      %s142 = sadd.s32 %s141, 1
      %p145 = scmp.eq.s32.totalorder %s23, 3
      %p146 = scmp.ne.s32.totalorder %s141, %s143
      %p147 = scmp.eq.s32.totalorder %s23, 0
      %p148 = por %p146, %p147
      %p149 = scmp.ne.s32.totalorder %s141, %s143
      %p150 = scmp.eq.s32.totalorder %s28, 3
      %p151 = por %p149, %p150
      %p152 = scmp.ne.s32.totalorder %s143, %s144
      %p153 = scmp.eq.s32.totalorder %s28, 0
      %p154 = por %p152, %p153
      %p155 = scmp.ne.s32.totalorder %s143, %s144
      %p156 = scmp.eq.s32.totalorder %s29, 3
      %p157 = por %p155, %p156
      %p159 = scmp.ne.s32.totalorder %s144, %s158
      %p160 = scmp.eq.s32.totalorder %s29, 0
      %p161 = por %p159, %p160
      %s163 = sadd.s32 %s162, 1
      %p166 = scmp.eq.s32.totalorder %s23, 3
      %p167 = scmp.ne.s32.totalorder %s162, %s164
      %p168 = scmp.eq.s32.totalorder %s23, 0
      %p169 = por %p167, %p168
      %p170 = scmp.ne.s32.totalorder %s162, %s164
      %p171 = scmp.eq.s32.totalorder %s28, 3
      %p172 = por %p170, %p171
      %p173 = scmp.ne.s32.totalorder %s164, %s165
      %p174 = scmp.eq.s32.totalorder %s28, 0
      %p175 = por %p173, %p174
      %p176 = scmp.ne.s32.totalorder %s164, %s165
      %p177 = scmp.eq.s32.totalorder %s29, 3
      %p178 = por %p176, %p177
      %p180 = scmp.ne.s32.totalorder %s165, %s179
      %p181 = scmp.eq.s32.totalorder %s29, 0
      %p182 = por %p180, %p181
      %s184 = sadd.s32 %s183, 1
      %p187 = scmp.eq.s32.totalorder %s23, 3
      %p188 = scmp.ne.s32.totalorder %s183, %s185
      %p189 = scmp.eq.s32.totalorder %s23, 0
      %p190 = por %p188, %p189
      %p191 = scmp.ne.s32.totalorder %s183, %s185
      %p192 = scmp.eq.s32.totalorder %s28, 3
      %p193 = por %p191, %p192
      %p194 = scmp.ne.s32.totalorder %s185, %s186
      %p195 = scmp.eq.s32.totalorder %s28, 0
      %p196 = por %p194, %p195
      %p197 = scmp.ne.s32.totalorder %s185, %s186
      %p198 = scmp.eq.s32.totalorder %s29, 3
      %p199 = por %p197, %p198
      %p201 = scmp.ne.s32.totalorder %s186, %s200
      %p202 = scmp.eq.s32.totalorder %s29, 0
      %p203 = por %p201, %p202
      %s205 = sadd.s32 %s204, 1
      %p208 = scmp.eq.s32.totalorder %s23, 3
      %p209 = scmp.ne.s32.totalorder %s204, %s206
      %p210 = scmp.eq.s32.totalorder %s23, 0
      %p211 = por %p209, %p210
      %p212 = scmp.ne.s32.totalorder %s204, %s206
      %p213 = scmp.eq.s32.totalorder %s28, 3
      %p214 = por %p212, %p213
      %p215 = scmp.ne.s32.totalorder %s206, %s207
      %p216 = scmp.eq.s32.totalorder %s28, 0
      %p217 = por %p215, %p216
      %p218 = scmp.ne.s32.totalorder %s206, %s207
      %p219 = scmp.eq.s32.totalorder %s29, 3
      %p220 = por %p218, %p219
      %p222 = scmp.ne.s32.totalorder %s207, %s221
      %p223 = scmp.eq.s32.totalorder %s29, 0
      %p224 = por %p222, %p223
      %s225 = ssub.s32 %s23, %s30
      %p226 = scmp.eq.s32.totalorder %s225, 0
      %s228 = sadd.s32 %s227, 1
      %s229 = scalar_select %p226, %s227, %s228
      %p232 = pneg %p226
      %p233 = scmp.eq.s32.totalorder %s23, 3
      %p234 = por %p232, %p233
      %p235 = scmp.ne.s32.totalorder %s227, %s230
      %p236 = scmp.eq.s32.totalorder %s23, 0
      %p237 = por %p235, %p236
      %p238 = scmp.ne.s32.totalorder %s227, %s230
      %p239 = scmp.eq.s32.totalorder %s28, 3
      %p240 = por %p238, %p239
      %p241 = scmp.ne.s32.totalorder %s230, %s231
      %p242 = scmp.eq.s32.totalorder %s28, 0
      %p243 = por %p241, %p242
      %p244 = scmp.ne.s32.totalorder %s230, %s231
      %p245 = scmp.eq.s32.totalorder %s29, 3
      %p246 = por %p244, %p245
      %p248 = scmp.ne.s32.totalorder %s231, %s247
      %p249 = scmp.eq.s32.totalorder %s29, 0
      %p250 = por %p248, %p249
      %p251 = scmp.le.s32.totalorder 1, %s23
      %p252 = scmp.lt.s32.totalorder %s23, 5
      %p253 = pnand %p251, %p252
      %p254 = pneg %p253
      // Predicated region
      $region9: #{bnnn_forward_grouped.1} parent=5 // pred_check
        _
      $region10: #{bnnn_forward_grouped.1} parent=5 // pred_check_branch
        %256 = sbr.rel (%p253) target = $region12
      $region11: #{bnnn_forward_grouped.1} parent=5 // pred_region
        %s257 = ssub.s32 %s23, 1
        // Predicated region
        $region13: #{bnnn_forward_grouped.1} parent=11 // pred_check
          %p258 = pneg %p70
        $region14: #{bnnn_forward_grouped.1} parent=11 // pred_check_branch
          %260 = sbr.rel (%p258) target = $region16
        $region15: #{bnnn_forward_grouped.1} parent=11 // pred_region
          %s262 = ssub.s32 2048, 2048
          %263 = vsyncadd [#allocation6], %s262
          %s264 = sshll.u32 [#allocation5], 4
          %s265 = int_to_ptr.vmem [resolvable:$true] %s264
          %270 = dma.hbm_to_vmem [thread:$0]  %s1, 2048, %s265, [#allocation6], 512, 512, 32
        $region16: #{bnnn_forward_grouped.1} parent=11 // pred_fallthru
          _
        // Predicated region
        $region17: #{bnnn_forward_grouped.1} parent=11 // pred_check
          %p271 = pneg %p91
        $region18: #{bnnn_forward_grouped.1} parent=11 // pred_check_branch
          %273 = sbr.rel (%p271) target = $region20
        $region19: #{bnnn_forward_grouped.1} parent=11 // pred_region
          _
        $region20: #{bnnn_forward_grouped.1} parent=11 // pred_fallthru
          _
        // Predicated region
        $region21: #{bnnn_forward_grouped.1} parent=11 // pred_check
          %p274 = pneg %p112
        $region22: #{bnnn_forward_grouped.1} parent=11 // pred_check_branch
          %276 = sbr.rel (%p274) target = $region24
        $region23: #{bnnn_forward_grouped.1} parent=11 // pred_region
          _
        $region24: #{bnnn_forward_grouped.1} parent=11 // pred_fallthru
          _
        // Predicated region
        $region25: #{bnnn_forward_grouped.1} parent=11 // pred_check
          %p277 = pneg %p133
        $region26: #{bnnn_forward_grouped.1} parent=11 // pred_check_branch
          %279 = sbr.rel (%p277) target = $region28
        $region27: #{bnnn_forward_grouped.1} parent=11 // pred_region
          %s281 = ssub.s32 8192, 8192
          %282 = vsyncadd [#allocation6], %s281
          %s283 = sshll.u32 [#allocation7], 4
          %s284 = int_to_ptr.vmem [resolvable:$true] %s283
          %289 = dma.hbm_to_vmem [thread:$0]  %s4, 8192, %s284, [#allocation6], 128, 128, 8
        $region28: #{bnnn_forward_grouped.1} parent=11 // pred_fallthru
          _
        // Predicated region
        $region29: #{bnnn_forward_grouped.1} parent=11 // pred_check
          %p290 = pneg %p154
        $region30: #{bnnn_forward_grouped.1} parent=11 // pred_check_branch
          %292 = sbr.rel (%p290) target = $region32
        $region31: #{bnnn_forward_grouped.1} parent=11 // pred_region
          _
        $region32: #{bnnn_forward_grouped.1} parent=11 // pred_fallthru
          _
        // Predicated region
        $region33: #{bnnn_forward_grouped.1} parent=11 // pred_check
          %p293 = pneg %p175
        $region34: #{bnnn_forward_grouped.1} parent=11 // pred_check_branch
          %295 = sbr.rel (%p293) target = $region36
        $region35: #{bnnn_forward_grouped.1} parent=11 // pred_region
          _
        $region36: #{bnnn_forward_grouped.1} parent=11 // pred_fallthru
          _
        // Predicated region
        $region37: #{bnnn_forward_grouped.1} parent=11 // pred_check
          %p296 = pneg %p196
        $region38: #{bnnn_forward_grouped.1} parent=11 // pred_check_branch
          %298 = sbr.rel (%p296) target = $region40
        $region39: #{bnnn_forward_grouped.1} parent=11 // pred_region
          %s300 = ssub.s32 2048, 2048
          %301 = vsyncadd [#allocation9], %s300
          %s302 = sshll.u32 [#allocation8], 4
          %s303 = int_to_ptr.vmem [resolvable:$true] %s302
          %308 = dma.hbm_to_vmem [thread:$0]  %s7, 2048, %s303, [#allocation9], 128, 128, 8
        $region40: #{bnnn_forward_grouped.1} parent=11 // pred_fallthru
          _
        // Predicated region
        $region41: #{bnnn_forward_grouped.1} parent=11 // pred_check
          %p309 = pneg %p217
        $region42: #{bnnn_forward_grouped.1} parent=11 // pred_check_branch
          %311 = sbr.rel (%p309) target = $region44
        $region43: #{bnnn_forward_grouped.1} parent=11 // pred_region
          _
        $region44: #{bnnn_forward_grouped.1} parent=11 // pred_fallthru
          _
      $region12: #{bnnn_forward_grouped.1} parent=5 // pred_fallthru
        _
      %p312 = scmp.lt.s32.totalorder %s23, 4
      // Predicated region
      $region45: #{bnnn_forward_grouped.1} parent=5 // pred_check
        %p313 = pneg %p312
      $region46: #{bnnn_forward_grouped.1} parent=5 // pred_check_branch
        %315 = sbr.rel (%p313) target = $region48
      $region47: #{bnnn_forward_grouped.1} parent=5 // pred_region
        // Predicated region
        $region49: #{bnnn_forward_grouped.1} parent=47 // pred_check
          %p316 = pneg %p43
        $region50: #{bnnn_forward_grouped.1} parent=47 // pred_check_branch
          %318 = sbr.rel (%p316) target = $region52
        $region51: #{bnnn_forward_grouped.1} parent=47 // pred_region
          %s319 = sand.u32 %s33, 1
          %s320 = scalar_lea.sflag [#allocation3], %s319
          %s321 = sand.u32 %s33, 1
          %s322 = smul.addr %s321, 8
          %s323 = scalar_lea.vmem [#allocation2], %s322
          %s325 = ssub.s32 128, 128
          %326 = vsyncadd %s320, %s325
          %s327 = smul.addr %s23, 128
          %s328 = scalar_lea.hbm %s0, %s327
          %s330 = sshll.u32 %s323, 4
          %s331 = int_to_ptr.vmem [resolvable:$true] %s330
          %333 = dma.hbm_to_vmem [thread:$0]  %s328, 128, %s331, %s320
        $region52: #{bnnn_forward_grouped.1} parent=47 // pred_fallthru
          _
      $region48: #{bnnn_forward_grouped.1} parent=5 // pred_fallthru
        _
      %p334 = scmp.le.s32.totalorder 1, %s23
      %p335 = scmp.lt.s32.totalorder %s23, 5
      %p336 = pnand %p334, %p335
      %p337 = pneg %p336
      // Predicated region
      $region53: #{bnnn_forward_grouped.1} parent=5 // pred_check
        _
      $region54: #{bnnn_forward_grouped.1} parent=5 // pred_check_branch
        %339 = sbr.rel (%p336) target = $region56
      $region55: #{bnnn_forward_grouped.1} parent=5 // pred_region
        %s340 = ssub.s32 %s23, 1
        %s341 = sand.u32 %s36, 1
        %s342 = scalar_lea.sflag [#allocation3], %s341
        %s343 = sand.u32 %s36, 1
        %s344 = smul.addr %s343, 8
        %s345 = scalar_lea.vmem [#allocation2], %s344
        // Predicated region
        $region57: #{bnnn_forward_grouped.1} parent=55 // pred_check
          %p346 = pneg %p49
        $region58: #{bnnn_forward_grouped.1} parent=55 // pred_check_branch
          %348 = sbr.rel (%p346) target = $region60
        $region59: #{bnnn_forward_grouped.1} parent=55 // pred_region
          %349 = dma.done %s342, 128
        $region60: #{bnnn_forward_grouped.1} parent=55 // pred_fallthru
          _
        // Predicated region
        $region61: #{bnnn_forward_grouped.1} parent=55 // pred_check
          %p350 = pneg %p70
        $region62: #{bnnn_forward_grouped.1} parent=55 // pred_check_branch
          %352 = sbr.rel (%p350) target = $region64
        $region63: #{bnnn_forward_grouped.1} parent=55 // pred_region
          %353 = dma.done [#allocation6], 2048
        $region64: #{bnnn_forward_grouped.1} parent=55 // pred_fallthru
          _
        // Predicated region
        $region65: #{bnnn_forward_grouped.1} parent=55 // pred_check
          %p354 = pneg %p133
        $region66: #{bnnn_forward_grouped.1} parent=55 // pred_check_branch
          %356 = sbr.rel (%p354) target = $region68
        $region67: #{bnnn_forward_grouped.1} parent=55 // pred_region
          %357 = dma.done [#allocation6], 8192
        $region68: #{bnnn_forward_grouped.1} parent=55 // pred_fallthru
          _
        // Predicated region
        $region69: #{bnnn_forward_grouped.1} parent=55 // pred_check
          %p358 = pneg %p196
        $region70: #{bnnn_forward_grouped.1} parent=55 // pred_check_branch
          %360 = sbr.rel (%p358) target = $region72
        $region71: #{bnnn_forward_grouped.1} parent=55 // pred_region
          %361 = dma.done [#allocation9], 2048
        $region72: #{bnnn_forward_grouped.1} parent=55 // pred_fallthru
          _
        %s362 = sand.u32 %s36, 1
        %s363 = scalar_lea.sflag [#allocation3], %s362
        %s364 = sand.u32 %s36, 1
        %s365 = smul.addr %s364, 8
        %s366 = scalar_lea.vmem [#allocation2], %s365
        %p367 = pneg %p49
        %p368 = pneg %p46
        %p369 = pneg %p70
        %p370 = pneg %p67
        %p371 = pneg %p91
        %p372 = pneg %p88
        %p373 = pneg %p112
        %p374 = pneg %p109
        %p375 = pneg %p133
        %p376 = pneg %p130
        %p377 = pneg %p154
        %p378 = pneg %p151
        %p379 = pneg %p175
        %p380 = pneg %p172
        %p381 = pneg %p196
        %p382 = pneg %p193
        %p383 = pneg %p217
        %p384 = pneg %p214
        %p385 = pneg %p243
        %p386 = pneg %p240
        %s387 = sand.u32 %s230, 1
        %s388 = scalar_lea.sflag [#allocation4], %s387
        %s389 = sand.u32 %s230, 1
        %s390 = smul.addr %s389, 8
        %s391 = scalar_lea.vmem [#allocation10], %s390
        %v392 = vld [vmem:[%s345] sm:$0xff]
        %v393 = vld [vmem:[#allocation5] sm:$0xff]
        %v394 = vld [vmem:[#allocation5 + $0x8] sm:$0xff]
        %v395 = vld [vmem:[#allocation5 + $0x10] sm:$0xff]
        %v396 = vld [vmem:[#allocation5 + $0x18] sm:$0xff]
        %v397 = vld [vmem:[#allocation5 + $0x20] sm:$0xff]
        %v398 = vld [vmem:[#allocation5 + $0x28] sm:$0xff]
        %v399 = vld [vmem:[#allocation5 + $0x30] sm:$0xff]
        %v400 = vld [vmem:[#allocation5 + $0x38] sm:$0xff]
        %v401 = vld [vmem:[#allocation5 + $0x40] sm:$0xff]
        %v402 = vld [vmem:[#allocation5 + $0x48] sm:$0xff]
        %v403 = vld [vmem:[#allocation5 + $0x50] sm:$0xff]
        %v404 = vld [vmem:[#allocation5 + $0x58] sm:$0xff]
        %v405 = vld [vmem:[#allocation5 + $0x60] sm:$0xff]
        %v406 = vld [vmem:[#allocation5 + $0x68] sm:$0xff]
        %v407 = vld [vmem:[#allocation5 + $0x70] sm:$0xff]
        %v408 = vld [vmem:[#allocation5 + $0x78] sm:$0xff]
        %vm409 = vcmask 261120
        %v411 = vsel %vm409, %v392, 0
        %413 = vmatprep.subr.mxu0 %v394
        %414 = vmatpush1.msra.mxu0 %v393
        %415 = vmatprep.subr.mxu0 %v398
        %416 = vmatpush1.msra.mxu0 %v397
        %417 = vmatprep.subr.mxu0 %v402
        %418 = vmatpush1.msra.mxu0 %v401
        %419 = vmatprep.subr.mxu0 %v406
        %420 = vmatpush1.msra.mxu0 %v405
        %421 = vmatprep.subr.mxu0 0.0
        %422 = vmatpush1.msra.mxu0 0.0
        %423 = vmatprep.subr.mxu0 0.0
        %424 = vmatpush1.msra.mxu0 0.0
        %425 = vmatprep.subr.mxu0 0.0
        %426 = vmatpush1.msra.mxu0 0.0
        %427 = vmatprep.subr.mxu0 0.0
        %428 = vmatpush1.msra.mxu0 0.0
        %429 = vmatprep.subr.mxu0 0.0
        %430 = vmatpush1.msra.mxu0 0.0
        %431 = vmatprep.subr.mxu0 0.0
        %432 = vmatpush1.msra.mxu0 0.0
        %433 = vmatprep.subr.mxu0 0.0
        %434 = vmatpush1.msra.mxu0 0.0
        %435 = vmatprep.subr.mxu0 0.0
        %436 = vmatpush1.msra.mxu0 0.0
        %437 = vmatprep.subr.mxu0 0.0
        %438 = vmatpush1.msra.mxu0 0.0
        %439 = vmatprep.subr.mxu0 0.0
        %440 = vmatpush1.msra.mxu0 0.0
        %441 = vmatprep.subr.mxu0 0.0
        %442 = vmatpush1.msra.mxu0 0.0
        %443 = vmatprep.subr.mxu0 0.0
        %444 = vmatpush1.msra.mxu0 0.0
        %445 = vmatprep.subr.mxu0 0.0
        %446 = vmatpush1.msra.mxu0 0.0
        %447 = vmatprep.subr.mxu0 0.0
        %448 = vmatpush1.msra.mxu0 0.0
        %449 = vmatprep.subr.mxu0 0.0
        %450 = vmatpush1.msra.mxu0 0.0
        %451 = vmatprep.subr.mxu0 0.0
        %452 = vmatpush1.msra.mxu0 0.0
        %453 = vmatprep.subr.mxu0 0.0
        %454 = vmatpush1.msra.mxu0 0.0
        %455 = vmatprep.subr.mxu0 0.0
        %456 = vmatpush1.msra.mxu0 0.0
        %457 = vmatprep.subr.mxu0 0.0
        %458 = vmatpush1.msra.mxu0 0.0
        %459 = vmatprep.subr.mxu0 0.0
        %460 = vmatpush1.msra.mxu0 0.0
        %461 = vmatprep.subr.mxu0 0.0
        %462 = vmatpush1.msra.mxu0 0.0
        %463 = vmatprep.subr.mxu0 0.0
        %464 = vmatpush1.msra.mxu0 0.0
        %465 = vmatprep.subr.mxu0 0.0
        %466 = vmatpush1.msra.mxu0 0.0
        %467 = vmatprep.subr.mxu0 0.0
        %468 = vmatpush1.msra.mxu0 0.0
        %469 = vmatprep.subr.mxu0 0.0
        %470 = vmatpush1.msra.mxu0 0.0
        %471 = vmatprep.subr.mxu0 0.0
        %472 = vmatpush1.msra.mxu0 0.0
        %473 = vmatprep.subr.mxu0 0.0
        %474 = vmatpush1.msra.mxu0 0.0
        %475 = vmatprep.subr.mxu0 0.0
        %476 = vmatpush1.msra.mxu0 0.0
        %477 = vmatprep.mubr.f32.mxu0 0.0
        %478 = vmatmul.mubr.f32.gmra.mrb[0].mxu0 %v411
        %v479 = vpop.f32.mrb[0].mxu0
        %v480 = vadd.f32 0.0, %v479
        %v481 = vpop.f32.mrb[0].mxu0
        %v482 = vadd.f32 0.0, %v481
        %483 = vdwg.mxu0
        %484 = vmatprep.subr.mxu0 %v396
        %485 = vmatpush1.msra.mxu0 %v395
        %486 = vmatprep.subr.mxu0 %v400
        %487 = vmatpush1.msra.mxu0 %v399
        %488 = vmatprep.subr.mxu0 %v404
        %489 = vmatpush1.msra.mxu0 %v403
        %490 = vmatprep.subr.mxu0 %v408
        %491 = vmatpush1.msra.mxu0 %v407
        %492 = vmatprep.subr.mxu0 0.0
        %493 = vmatpush1.msra.mxu0 0.0
        %494 = vmatprep.subr.mxu0 0.0
        %495 = vmatpush1.msra.mxu0 0.0
        %496 = vmatprep.subr.mxu0 0.0
        %497 = vmatpush1.msra.mxu0 0.0
        %498 = vmatprep.subr.mxu0 0.0
        %499 = vmatpush1.msra.mxu0 0.0
        %500 = vmatprep.subr.mxu0 0.0
        %501 = vmatpush1.msra.mxu0 0.0
        %502 = vmatprep.subr.mxu0 0.0
        %503 = vmatpush1.msra.mxu0 0.0
        %504 = vmatprep.subr.mxu0 0.0
        %505 = vmatpush1.msra.mxu0 0.0
        %506 = vmatprep.subr.mxu0 0.0
        %507 = vmatpush1.msra.mxu0 0.0
        %508 = vmatprep.subr.mxu0 0.0
        %509 = vmatpush1.msra.mxu0 0.0
        %510 = vmatprep.subr.mxu0 0.0
        %511 = vmatpush1.msra.mxu0 0.0
        %512 = vmatprep.subr.mxu0 0.0
        %513 = vmatpush1.msra.mxu0 0.0
        %514 = vmatprep.subr.mxu0 0.0
        %515 = vmatpush1.msra.mxu0 0.0
        %516 = vmatprep.subr.mxu0 0.0
        %517 = vmatpush1.msra.mxu0 0.0
        %518 = vmatprep.subr.mxu0 0.0
        %519 = vmatpush1.msra.mxu0 0.0
        %520 = vmatprep.subr.mxu0 0.0
        %521 = vmatpush1.msra.mxu0 0.0
        %522 = vmatprep.subr.mxu0 0.0
        %523 = vmatpush1.msra.mxu0 0.0
        %524 = vmatprep.subr.mxu0 0.0
        %525 = vmatpush1.msra.mxu0 0.0
        %526 = vmatprep.subr.mxu0 0.0
        %527 = vmatpush1.msra.mxu0 0.0
        %528 = vmatprep.subr.mxu0 0.0
        %529 = vmatpush1.msra.mxu0 0.0
        %530 = vmatprep.subr.mxu0 0.0
        %531 = vmatpush1.msra.mxu0 0.0
        %532 = vmatprep.subr.mxu0 0.0
        %533 = vmatpush1.msra.mxu0 0.0
        %534 = vmatprep.subr.mxu0 0.0
        %535 = vmatpush1.msra.mxu0 0.0
        %536 = vmatprep.subr.mxu0 0.0
        %537 = vmatpush1.msra.mxu0 0.0
        %538 = vmatprep.subr.mxu0 0.0
        %539 = vmatpush1.msra.mxu0 0.0
        %540 = vmatprep.subr.mxu0 0.0
        %541 = vmatpush1.msra.mxu0 0.0
        %542 = vmatprep.subr.mxu0 0.0
        %543 = vmatpush1.msra.mxu0 0.0
        %544 = vmatprep.subr.mxu0 0.0
        %545 = vmatpush1.msra.mxu0 0.0
        %546 = vmatprep.subr.mxu0 0.0
        %547 = vmatpush1.msra.mxu0 0.0
        %548 = vmatprep.mubr.f32.mxu0 0.0
        %549 = vmatmul.mubr.f32.gmra.mrb[0].mxu0 %v411
        %v550 = vpop.f32.mrb[0].mxu0
        %v551 = vadd.f32 0.0, %v550
        %v552 = vpop.f32.mrb[0].mxu0
        %v553 = vadd.f32 0.0, %v552
        %554 = vdwg.mxu0
        %v555 = vld [vmem:[%s2] sm:$0xf]
        %v556 = vld [vmem:[%s3] sm:$0xf]
        %v557 = vrot.slane %v480, 4
        %v558 = vadd.f32 %v480, %v557
        %v559 = vrot.slane %v558, 2
        %v560 = vadd.f32 %v558, %v559
        %v561 = vrot.slane %v560, 1
        %v562 = vadd.f32 %v560, %v561
        %v563 = vrot.slane %v482, 4
        %v564 = vadd.f32 %v482, %v563
        %v565 = vrot.slane %v564, 2
        %v566 = vadd.f32 %v564, %v565
        %v567 = vrot.slane %v566, 1
        %v568 = vadd.f32 %v566, %v567
        %v569 = vrot.slane %v551, 4
        %v570 = vadd.f32 %v551, %v569
        %v571 = vrot.slane %v570, 2
        %v572 = vadd.f32 %v570, %v571
        %v573 = vrot.slane %v572, 1
        %v574 = vadd.f32 %v572, %v573
        %v575 = vrot.slane %v553, 4
        %v576 = vadd.f32 %v553, %v575
        %v577 = vrot.slane %v576, 2
        %v578 = vadd.f32 %v576, %v577
        %v579 = vrot.slane %v578, 1
        %v580 = vadd.f32 %v578, %v579
        %v581 = vmul.f32 %v562, 0.125
        %v582 = vmul.f32 %v568, 0.125
        %v583 = vmul.f32 %v574, 0.125
        %v584 = vmul.f32 %v580, 0.125
        %v585 = vmul.f32 %v480, %v480
        %v586 = vmul.f32 %v482, %v482
        %v587 = vmul.f32 %v551, %v551
        %v588 = vmul.f32 %v553, %v553
        %v589 = vrot.slane %v585, 4
        %v590 = vadd.f32 %v585, %v589
        %v591 = vrot.slane %v590, 2
        %v592 = vadd.f32 %v590, %v591
        %v593 = vrot.slane %v592, 1
        %v594 = vadd.f32 %v592, %v593
        %v595 = vrot.slane %v586, 4
        %v596 = vadd.f32 %v586, %v595
        %v597 = vrot.slane %v596, 2
        %v598 = vadd.f32 %v596, %v597
        %v599 = vrot.slane %v598, 1
        %v600 = vadd.f32 %v598, %v599
        %v601 = vrot.slane %v587, 4
        %v602 = vadd.f32 %v587, %v601
        %v603 = vrot.slane %v602, 2
        %v604 = vadd.f32 %v602, %v603
        %v605 = vrot.slane %v604, 1
        %v606 = vadd.f32 %v604, %v605
        %v607 = vrot.slane %v588, 4
        %v608 = vadd.f32 %v588, %v607
        %v609 = vrot.slane %v608, 2
        %v610 = vadd.f32 %v608, %v609
        %v611 = vrot.slane %v610, 1
        %v612 = vadd.f32 %v610, %v611
        %v613 = vmul.f32 %v594, 0.125
        %v614 = vmul.f32 %v600, 0.125
        %v615 = vmul.f32 %v606, 0.125
        %v616 = vmul.f32 %v612, 0.125
        %v617 = vmul.f32 %v581, %v581
        %v618 = vmul.f32 %v582, %v582
        %v619 = vmul.f32 %v583, %v583
        %v620 = vmul.f32 %v584, %v584
        %v621 = vsub.f32 %v613, %v617
        %v622 = vsub.f32 %v614, %v618
        %v623 = vsub.f32 %v615, %v619
        %v624 = vsub.f32 %v616, %v620
        %v625 = vmax.f32 %v621, 0.0
        %v626 = vmax.f32 %v622, 0.0
        %v627 = vmax.f32 %v623, 0.0
        %v628 = vmax.f32 %v624, 0.0
        %v629 = vadd.f32 %v625, 1e-05
        %v630 = vadd.f32 %v626, 1e-05
        %v631 = vadd.f32 %v627, 1e-05
        %v632 = vadd.f32 %v628, 1e-05
        %v633 = vrsqrt.pop %v629
        %v634 = vrsqrt.pop %v630
        %v635 = vrsqrt.pop %v631
        %v636 = vrsqrt.pop %v632
        %v641 = vcombine.low %v633, %v634
        %v642 = vcombine.low %v635, %v636
        %v644 = vunpack.c.l.s4 1966171168
        %v645 = vunpack.c.0.s8 %v644
        %v646 = vlaneseq
        %v647 = vshrl.u32 %v646, 7
        %v648 = vsub.s32 %v645, %v647
        %v649 = vrot.slane %v641, %v648
        %v651 = vunpack.c.l.s4 1966171168
        %v652 = vunpack.c.0.s8 %v651
        %v653 = vlaneseq
        %v654 = vshrl.u32 %v653, 7
        %v655 = vsub.s32 %v652, %v654
        %v656 = vrot.slane %v642, %v655
        %v657 = vcombine.low %v649, %v656
        %v659 = vunpack.c.l.s4 1966171168
        %v660 = vunpack.c.0.s8 %v659
        %v661 = vlaneseq
        %v662 = vshrl.u32 %v661, 7
        %v663 = vsub.s32 %v660, %v662
        %v664 = vrot.slane %v657, %v663
        %v666 = vmul.f32 %v555, %v664
        %v668 = vlaneseq
        %v669 = vshrl.u32 %v668, 7
        %v670 = vsub.s32 0, %v669
        %v671 = vrot.slane %v666, %v670
        %v672 = vlaneseq
        %v673 = vshrl.u32 %v672, 7
        %v674 = vsub.s32 1, %v673
        %v675 = vrot.slane %v666, %v674
        %v676 = vlaneseq
        %v677 = vshrl.u32 %v676, 7
        %v678 = vsub.s32 2, %v677
        %v679 = vrot.slane %v666, %v678
        %v680 = vlaneseq
        %v681 = vshrl.u32 %v680, 7
        %v682 = vsub.s32 3, %v681
        %v683 = vrot.slane %v666, %v682
        %v688 = vmul.f32 %v581, %v671
        %v689 = vmul.f32 %v582, %v675
        %v690 = vmul.f32 %v583, %v679
        %v691 = vmul.f32 %v584, %v683
        %v696 = vcombine.low %v688, %v689
        %v697 = vcombine.low %v690, %v691
        %v699 = vunpack.c.l.s4 1966171168
        %v700 = vunpack.c.0.s8 %v699
        %v701 = vlaneseq
        %v702 = vshrl.u32 %v701, 7
        %v703 = vsub.s32 %v700, %v702
        %v704 = vrot.slane %v696, %v703
        %v706 = vunpack.c.l.s4 1966171168
        %v707 = vunpack.c.0.s8 %v706
        %v708 = vlaneseq
        %v709 = vshrl.u32 %v708, 7
        %v710 = vsub.s32 %v707, %v709
        %v711 = vrot.slane %v697, %v710
        %v712 = vcombine.low %v704, %v711
        %v714 = vunpack.c.l.s4 1966171168
        %v715 = vunpack.c.0.s8 %v714
        %v716 = vlaneseq
        %v717 = vshrl.u32 %v716, 7
        %v718 = vsub.s32 %v715, %v717
        %v719 = vrot.slane %v712, %v718
        %v721 = vsub.f32 %v556, %v719
        %v722 = vmul.f32 %v480, %v671
        %v723 = vmul.f32 %v482, %v675
        %v724 = vmul.f32 %v551, %v679
        %v725 = vmul.f32 %v553, %v683
        %v727 = vlaneseq
        %v728 = vshrl.u32 %v727, 7
        %v729 = vsub.s32 0, %v728
        %v730 = vrot.slane %v721, %v729
        %v731 = vlaneseq
        %v732 = vshrl.u32 %v731, 7
        %v733 = vsub.s32 1, %v732
        %v734 = vrot.slane %v721, %v733
        %v735 = vlaneseq
        %v736 = vshrl.u32 %v735, 7
        %v737 = vsub.s32 2, %v736
        %v738 = vrot.slane %v721, %v737
        %v739 = vlaneseq
        %v740 = vshrl.u32 %v739, 7
        %v741 = vsub.s32 3, %v740
        %v742 = vrot.slane %v721, %v741
        %v747 = vadd.f32 %v722, %v730
        %v748 = vadd.f32 %v723, %v734
        %v749 = vadd.f32 %v724, %v738
        %v750 = vadd.f32 %v725, %v742
        %v751 = vmax.f32 %v747, 0.0
        %v752 = vmax.f32 %v748, 0.0
        %v753 = vmax.f32 %v749, 0.0
        %v754 = vmax.f32 %v750, 0.0
        %v755 = vmin.f32 %v751, 6.0
        %v756 = vmin.f32 %v752, 6.0
        %v757 = vmin.f32 %v753, 6.0
        %v758 = vmin.f32 %v754, 6.0
        %v759 = vld [vmem:[#allocation7] sm:$0xff]
        %v760 = vld [vmem:[#allocation7 + $0x8] sm:$0xff]
        %v761 = vld [vmem:[#allocation7 + $0x10] sm:$0xff]
        %v762 = vld [vmem:[#allocation7 + $0x18] sm:$0xff]
        %v763 = vld [vmem:[#allocation7 + $0x20] sm:$0xff]
        %v764 = vld [vmem:[#allocation7 + $0x28] sm:$0xff]
        %v765 = vld [vmem:[#allocation7 + $0x30] sm:$0xff]
        %v766 = vld [vmem:[#allocation7 + $0x38] sm:$0xff]
        %v767 = vld [vmem:[#allocation7 + $0x40] sm:$0xff]
        %v768 = vld [vmem:[#allocation7 + $0x48] sm:$0xff]
        %v769 = vld [vmem:[#allocation7 + $0x50] sm:$0xff]
        %v770 = vld [vmem:[#allocation7 + $0x58] sm:$0xff]
        %v771 = vld [vmem:[#allocation7 + $0x60] sm:$0xff]
        %v772 = vld [vmem:[#allocation7 + $0x68] sm:$0xff]
        %v773 = vld [vmem:[#allocation7 + $0x70] sm:$0xff]
        %v774 = vld [vmem:[#allocation7 + $0x78] sm:$0xff]
        %v775 = vld [vmem:[#allocation7 + $0x80] sm:$0xff]
        %v776 = vld [vmem:[#allocation7 + $0x88] sm:$0xff]
        %v777 = vld [vmem:[#allocation7 + $0x90] sm:$0xff]
        %v778 = vld [vmem:[#allocation7 + $0x98] sm:$0xff]
        %v779 = vld [vmem:[#allocation7 + $0xa0] sm:$0xff]
        %v780 = vld [vmem:[#allocation7 + $0xa8] sm:$0xff]
        %v781 = vld [vmem:[#allocation7 + $0xb0] sm:$0xff]
        %v782 = vld [vmem:[#allocation7 + $0xb8] sm:$0xff]
        %v783 = vld [vmem:[#allocation7 + $0xc0] sm:$0xff]
        %v784 = vld [vmem:[#allocation7 + $0xc8] sm:$0xff]
        %v785 = vld [vmem:[#allocation7 + $0xd0] sm:$0xff]
        %v786 = vld [vmem:[#allocation7 + $0xd8] sm:$0xff]
        %v787 = vld [vmem:[#allocation7 + $0xe0] sm:$0xff]
        %v788 = vld [vmem:[#allocation7 + $0xe8] sm:$0xff]
        %v789 = vld [vmem:[#allocation7 + $0xf0] sm:$0xff]
        %v790 = vld [vmem:[#allocation7 + $0xf8] sm:$0xff]
        %v791 = vld [vmem:[#allocation7 + $0x100] sm:$0xff]
        %v792 = vld [vmem:[#allocation7 + $0x108] sm:$0xff]
        %v793 = vld [vmem:[#allocation7 + $0x110] sm:$0xff]
        %v794 = vld [vmem:[#allocation7 + $0x118] sm:$0xff]
        %v795 = vld [vmem:[#allocation7 + $0x120] sm:$0xff]
        %v796 = vld [vmem:[#allocation7 + $0x128] sm:$0xff]
        %v797 = vld [vmem:[#allocation7 + $0x130] sm:$0xff]
        %v798 = vld [vmem:[#allocation7 + $0x138] sm:$0xff]
        %v799 = vld [vmem:[#allocation7 + $0x140] sm:$0xff]
        %v800 = vld [vmem:[#allocation7 + $0x148] sm:$0xff]
        %v801 = vld [vmem:[#allocation7 + $0x150] sm:$0xff]
        %v802 = vld [vmem:[#allocation7 + $0x158] sm:$0xff]
        %v803 = vld [vmem:[#allocation7 + $0x160] sm:$0xff]
        %v804 = vld [vmem:[#allocation7 + $0x168] sm:$0xff]
        %v805 = vld [vmem:[#allocation7 + $0x170] sm:$0xff]
        %v806 = vld [vmem:[#allocation7 + $0x178] sm:$0xff]
        %v807 = vld [vmem:[#allocation7 + $0x180] sm:$0xff]
        %v808 = vld [vmem:[#allocation7 + $0x188] sm:$0xff]
        %v809 = vld [vmem:[#allocation7 + $0x190] sm:$0xff]
        %v810 = vld [vmem:[#allocation7 + $0x198] sm:$0xff]
        %v811 = vld [vmem:[#allocation7 + $0x1a0] sm:$0xff]
        %v812 = vld [vmem:[#allocation7 + $0x1a8] sm:$0xff]
        %v813 = vld [vmem:[#allocation7 + $0x1b0] sm:$0xff]
        %v814 = vld [vmem:[#allocation7 + $0x1b8] sm:$0xff]
        %v815 = vld [vmem:[#allocation7 + $0x1c0] sm:$0xff]
        %v816 = vld [vmem:[#allocation7 + $0x1c8] sm:$0xff]
        %v817 = vld [vmem:[#allocation7 + $0x1d0] sm:$0xff]
        %v818 = vld [vmem:[#allocation7 + $0x1d8] sm:$0xff]
        %v819 = vld [vmem:[#allocation7 + $0x1e0] sm:$0xff]
        %v820 = vld [vmem:[#allocation7 + $0x1e8] sm:$0xff]
        %v821 = vld [vmem:[#allocation7 + $0x1f0] sm:$0xff]
        %v822 = vld [vmem:[#allocation7 + $0x1f8] sm:$0xff]
        %823 = vmatprep.subr.mxu0 0.0
        %824 = vmatpush1.msra.mxu0 %v759
        %825 = vmatprep.subr.mxu0 0.0
        %826 = vmatpush1.msra.mxu0 %v760
        %827 = vmatprep.subr.mxu0 0.0
        %828 = vmatpush1.msra.mxu0 %v761
        %829 = vmatprep.subr.mxu0 0.0
        %830 = vmatpush1.msra.mxu0 %v762
        %831 = vmatprep.subr.mxu0 0.0
        %832 = vmatpush1.msra.mxu0 %v763
        %833 = vmatprep.subr.mxu0 0.0
        %834 = vmatpush1.msra.mxu0 %v764
        %835 = vmatprep.subr.mxu0 0.0
        %836 = vmatpush1.msra.mxu0 %v765
        %837 = vmatprep.subr.mxu0 0.0
        %838 = vmatpush1.msra.mxu0 %v766
        %839 = vmatprep.subr.mxu0 0.0
        %840 = vmatpush1.msra.mxu0 %v767
        %841 = vmatprep.subr.mxu0 0.0
        %842 = vmatpush1.msra.mxu0 %v768
        %843 = vmatprep.subr.mxu0 0.0
        %844 = vmatpush1.msra.mxu0 %v769
        %845 = vmatprep.subr.mxu0 0.0
        %846 = vmatpush1.msra.mxu0 %v770
        %847 = vmatprep.subr.mxu0 0.0
        %848 = vmatpush1.msra.mxu0 %v771
        %849 = vmatprep.subr.mxu0 0.0
        %850 = vmatpush1.msra.mxu0 %v772
        %851 = vmatprep.subr.mxu0 0.0
        %852 = vmatpush1.msra.mxu0 %v773
        %853 = vmatprep.subr.mxu0 0.0
        %854 = vmatpush1.msra.mxu0 %v774
        %855 = vmatprep.subr.mxu0 0.0
        %856 = vmatpush1.msra.mxu0 %v775
        %857 = vmatprep.subr.mxu0 0.0
        %858 = vmatpush1.msra.mxu0 %v776
        %859 = vmatprep.subr.mxu0 0.0
        %860 = vmatpush1.msra.mxu0 %v777
        %861 = vmatprep.subr.mxu0 0.0
        %862 = vmatpush1.msra.mxu0 %v778
        %863 = vmatprep.subr.mxu0 0.0
        %864 = vmatpush1.msra.mxu0 %v779
        %865 = vmatprep.subr.mxu0 0.0
        %866 = vmatpush1.msra.mxu0 %v780
        %867 = vmatprep.subr.mxu0 0.0
        %868 = vmatpush1.msra.mxu0 %v781
        %869 = vmatprep.subr.mxu0 0.0
        %870 = vmatpush1.msra.mxu0 %v782
        %871 = vmatprep.subr.mxu0 0.0
        %872 = vmatpush1.msra.mxu0 %v783
        %873 = vmatprep.subr.mxu0 0.0
        %874 = vmatpush1.msra.mxu0 %v784
        %875 = vmatprep.subr.mxu0 0.0
        %876 = vmatpush1.msra.mxu0 %v785
        %877 = vmatprep.subr.mxu0 0.0
        %878 = vmatpush1.msra.mxu0 %v786
        %879 = vmatprep.subr.mxu0 0.0
        %880 = vmatpush1.msra.mxu0 %v787
        %881 = vmatprep.subr.mxu0 0.0
        %882 = vmatpush1.msra.mxu0 %v788
        %883 = vmatprep.subr.mxu0 0.0
        %884 = vmatpush1.msra.mxu0 %v789
        %885 = vmatprep.subr.mxu0 0.0
        %886 = vmatpush1.msra.mxu0 %v790
        %887 = vmatprep.mubr.f32.mxu0 %v756
        %888 = vmatmul.mubr.f32.gmra.mrb[0].mxu0 %v755
        %v889 = vpop.f32.mrb[0].mxu0
        %v890 = vadd.f32 0.0, %v889
        %v891 = vpop.f32.mrb[0].mxu0
        %892 = vdwg.mxu0
        %893 = vmatprep.subr.mxu0 0.0
        %894 = vmatpush1.msra.mxu0 %v791
        %895 = vmatprep.subr.mxu0 0.0
        %896 = vmatpush1.msra.mxu0 %v792
        %897 = vmatprep.subr.mxu0 0.0
        %898 = vmatpush1.msra.mxu0 %v793
        %899 = vmatprep.subr.mxu0 0.0
        %900 = vmatpush1.msra.mxu0 %v794
        %901 = vmatprep.subr.mxu0 0.0
        %902 = vmatpush1.msra.mxu0 %v795
        %903 = vmatprep.subr.mxu0 0.0
        %904 = vmatpush1.msra.mxu0 %v796
        %905 = vmatprep.subr.mxu0 0.0
        %906 = vmatpush1.msra.mxu0 %v797
        %907 = vmatprep.subr.mxu0 0.0
        %908 = vmatpush1.msra.mxu0 %v798
        %909 = vmatprep.subr.mxu0 0.0
        %910 = vmatpush1.msra.mxu0 %v799
        %911 = vmatprep.subr.mxu0 0.0
        %912 = vmatpush1.msra.mxu0 %v800
        %913 = vmatprep.subr.mxu0 0.0
        %914 = vmatpush1.msra.mxu0 %v801
        %915 = vmatprep.subr.mxu0 0.0
        %916 = vmatpush1.msra.mxu0 %v802
        %917 = vmatprep.subr.mxu0 0.0
        %918 = vmatpush1.msra.mxu0 %v803
        %919 = vmatprep.subr.mxu0 0.0
        %920 = vmatpush1.msra.mxu0 %v804
        %921 = vmatprep.subr.mxu0 0.0
        %922 = vmatpush1.msra.mxu0 %v805
        %923 = vmatprep.subr.mxu0 0.0
        %924 = vmatpush1.msra.mxu0 %v806
        %925 = vmatprep.subr.mxu0 0.0
        %926 = vmatpush1.msra.mxu0 %v807
        %927 = vmatprep.subr.mxu0 0.0
        %928 = vmatpush1.msra.mxu0 %v808
        %929 = vmatprep.subr.mxu0 0.0
        %930 = vmatpush1.msra.mxu0 %v809
        %931 = vmatprep.subr.mxu0 0.0
        %932 = vmatpush1.msra.mxu0 %v810
        %933 = vmatprep.subr.mxu0 0.0
        %934 = vmatpush1.msra.mxu0 %v811
        %935 = vmatprep.subr.mxu0 0.0
        %936 = vmatpush1.msra.mxu0 %v812
        %937 = vmatprep.subr.mxu0 0.0
        %938 = vmatpush1.msra.mxu0 %v813
        %939 = vmatprep.subr.mxu0 0.0
        %940 = vmatpush1.msra.mxu0 %v814
        %941 = vmatprep.subr.mxu0 0.0
        %942 = vmatpush1.msra.mxu0 %v815
        %943 = vmatprep.subr.mxu0 0.0
        %944 = vmatpush1.msra.mxu0 %v816
        %945 = vmatprep.subr.mxu0 0.0
        %946 = vmatpush1.msra.mxu0 %v817
        %947 = vmatprep.subr.mxu0 0.0
        %948 = vmatpush1.msra.mxu0 %v818
        %949 = vmatprep.subr.mxu0 0.0
        %950 = vmatpush1.msra.mxu0 %v819
        %951 = vmatprep.subr.mxu0 0.0
        %952 = vmatpush1.msra.mxu0 %v820
        %953 = vmatprep.subr.mxu0 0.0
        %954 = vmatpush1.msra.mxu0 %v821
        %955 = vmatprep.subr.mxu0 0.0
        %956 = vmatpush1.msra.mxu0 %v822
        %957 = vmatprep.mubr.f32.mxu0 %v758
        %958 = vmatmul.mubr.f32.gmra.mrb[0].mxu0 %v757
        %v959 = vpop.f32.mrb[0].mxu0
        %v960 = vadd.f32 %v890, %v959
        %v961 = vpop.f32.mrb[0].mxu0
        %962 = vdwg.mxu0
        %v963 = vld [vmem:[%s5] sm:$0x1]
        %v964 = vld [vmem:[%s6] sm:$0x1]
        %v965 = vrot.slane %v960, 4
        %v966 = vadd.f32 %v960, %v965
        %v967 = vrot.slane %v966, 2
        %v968 = vadd.f32 %v966, %v967
        %v969 = vrot.slane %v968, 1
        %v970 = vadd.f32 %v968, %v969
        %v971 = vmul.f32 %v970, 0.125
        %v972 = vmul.f32 %v960, %v960
        %v973 = vrot.slane %v972, 4
        %v974 = vadd.f32 %v972, %v973
        %v975 = vrot.slane %v974, 2
        %v976 = vadd.f32 %v974, %v975
        %v977 = vrot.slane %v976, 1
        %v978 = vadd.f32 %v976, %v977
        %v979 = vmul.f32 %v978, 0.125
        %v980 = vmul.f32 %v971, %v971
        %v981 = vsub.f32 %v979, %v980
        %v982 = vmax.f32 %v981, 0.0
        %v983 = vadd.f32 %v982, 1e-05
        %v984 = vrsqrt.pop %v983
        %v985 = vmul.f32 %v963, %v984
        %v986 = vmul.f32 %v971, %v985
        %v987 = vsub.f32 %v964, %v986
        %v989 = vlaneseq
        %v990 = vshrl.u32 %v989, 7
        %v991 = vsub.s32 0, %v990
        %v992 = vrot.slane %v985, %v991
        %v994 = vmul.f32 %v960, %v992
        %v996 = vlaneseq
        %v997 = vshrl.u32 %v996, 7
        %v998 = vsub.s32 0, %v997
        %v999 = vrot.slane %v987, %v998
        %v1001 = vadd.f32 %v994, %v999
        %v1002 = vmax.f32 %v1001, 0.0
        %v1003 = vmin.f32 %v1002, 6.0
        %v1004 = vld [vmem:[#allocation8] sm:$0xff]
        %v1005 = vld [vmem:[#allocation8 + $0x8] sm:$0xff]
        %v1006 = vld [vmem:[#allocation8 + $0x10] sm:$0xff]
        %v1007 = vld [vmem:[#allocation8 + $0x18] sm:$0xff]
        %v1008 = vld [vmem:[#allocation8 + $0x20] sm:$0xff]
        %v1009 = vld [vmem:[#allocation8 + $0x28] sm:$0xff]
        %v1010 = vld [vmem:[#allocation8 + $0x30] sm:$0xff]
        %v1011 = vld [vmem:[#allocation8 + $0x38] sm:$0xff]
        %v1012 = vld [vmem:[#allocation8 + $0x40] sm:$0xff]
        %v1013 = vld [vmem:[#allocation8 + $0x48] sm:$0xff]
        %v1014 = vld [vmem:[#allocation8 + $0x50] sm:$0xff]
        %v1015 = vld [vmem:[#allocation8 + $0x58] sm:$0xff]
        %v1016 = vld [vmem:[#allocation8 + $0x60] sm:$0xff]
        %v1017 = vld [vmem:[#allocation8 + $0x68] sm:$0xff]
        %v1018 = vld [vmem:[#allocation8 + $0x70] sm:$0xff]
        %v1019 = vld [vmem:[#allocation8 + $0x78] sm:$0xff]
        %v1020 = vld [vmem:[%s8] sm:$0x1]
        %v1022 = vlaneseq
        %v1023 = vshrl.u32 %v1022, 7
        %v1024 = vsub.s32 0, %v1023
        %v1025 = vrot.slane %v1020, %v1024
        %1027 = vmatprep.subr.mxu0 0.0
        %1028 = vmatpush1.msra.mxu0 %v1004
        %1029 = vmatprep.subr.mxu0 0.0
        %1030 = vmatpush1.msra.mxu0 %v1005
        %1031 = vmatprep.subr.mxu0 0.0
        %1032 = vmatpush1.msra.mxu0 %v1006
        %1033 = vmatprep.subr.mxu0 0.0
        %1034 = vmatpush1.msra.mxu0 %v1007
        %1035 = vmatprep.subr.mxu0 0.0
        %1036 = vmatpush1.msra.mxu0 %v1008
        %1037 = vmatprep.subr.mxu0 0.0
        %1038 = vmatpush1.msra.mxu0 %v1009
        %1039 = vmatprep.subr.mxu0 0.0
        %1040 = vmatpush1.msra.mxu0 %v1010
        %1041 = vmatprep.subr.mxu0 0.0
        %1042 = vmatpush1.msra.mxu0 %v1011
        %1043 = vmatprep.subr.mxu0 0.0
        %1044 = vmatpush1.msra.mxu0 %v1012
        %1045 = vmatprep.subr.mxu0 0.0
        %1046 = vmatpush1.msra.mxu0 %v1013
        %1047 = vmatprep.subr.mxu0 0.0
        %1048 = vmatpush1.msra.mxu0 %v1014
        %1049 = vmatprep.subr.mxu0 0.0
        %1050 = vmatpush1.msra.mxu0 %v1015
        %1051 = vmatprep.subr.mxu0 0.0
        %1052 = vmatpush1.msra.mxu0 %v1016
        %1053 = vmatprep.subr.mxu0 0.0
        %1054 = vmatpush1.msra.mxu0 %v1017
        %1055 = vmatprep.subr.mxu0 0.0
        %1056 = vmatpush1.msra.mxu0 %v1018
        %1057 = vmatprep.subr.mxu0 0.0
        %1058 = vmatpush1.msra.mxu0 %v1019
        %1059 = vmatprep.subr.mxu0 0.0
        %1060 = vmatpush1.msra.mxu0 0.0
        %1061 = vmatprep.subr.mxu0 0.0
        %1062 = vmatpush1.msra.mxu0 0.0
        %1063 = vmatprep.subr.mxu0 0.0
        %1064 = vmatpush1.msra.mxu0 0.0
        %1065 = vmatprep.subr.mxu0 0.0
        %1066 = vmatpush1.msra.mxu0 0.0
        %1067 = vmatprep.subr.mxu0 0.0
        %1068 = vmatpush1.msra.mxu0 0.0
        %1069 = vmatprep.subr.mxu0 0.0
        %1070 = vmatpush1.msra.mxu0 0.0
        %1071 = vmatprep.subr.mxu0 0.0
        %1072 = vmatpush1.msra.mxu0 0.0
        %1073 = vmatprep.subr.mxu0 0.0
        %1074 = vmatpush1.msra.mxu0 0.0
        %1075 = vmatprep.subr.mxu0 0.0
        %1076 = vmatpush1.msra.mxu0 0.0
        %1077 = vmatprep.subr.mxu0 0.0
        %1078 = vmatpush1.msra.mxu0 0.0
        %1079 = vmatprep.subr.mxu0 0.0
        %1080 = vmatpush1.msra.mxu0 0.0
        %1081 = vmatprep.subr.mxu0 0.0
        %1082 = vmatpush1.msra.mxu0 0.0
        %1083 = vmatprep.subr.mxu0 0.0
        %1084 = vmatpush1.msra.mxu0 0.0
        %1085 = vmatprep.subr.mxu0 0.0
        %1086 = vmatpush1.msra.mxu0 0.0
        %1087 = vmatprep.subr.mxu0 0.0
        %1088 = vmatpush1.msra.mxu0 0.0
        %1089 = vmatprep.subr.mxu0 0.0
        %1090 = vmatpush1.msra.mxu0 0.0
        %1091 = vmatprep.mubr.f32.mxu0 0.0
        %1092 = vmatmul.mubr.f32.gmra.mrb[0].mxu0 %v1003
        %v1093 = vpop.f32.mrb[0].mxu0
        %v1094 = vadd.f32 %v1025, %v1093
        %v1095 = vpop.f32.mrb[0].mxu0
        %1096 = vdwg.mxu0
        %1097 = vmax.xlane.f32.xlu0 %v1094
        %v1098 = vpop.xlane.xlu0 %1097
        %v1099 = vsub.f32 %v1094, %v1098
        %v1100 = vmul.f32 %v1099, 1.442695
        %v1101 = vpow.pop %v1100
        %1102 = vadd.xlane.f32.xlu0 %v1101
        %v1103 = vpop.xlane.xlu0 %1102
        %v1104 = vlog2.pop %v1103
        %v1105 = vmul.f32 %v1104, 0.6931472
        %v1106 = vsub.f32 %v1099, %v1105
        %1107 = vst [vmem:[%s391] sm:$0xff] %v1106
        %s1108 = sand.u32 %s230, 1
        %s1109 = scalar_lea.sflag [#allocation4], %s1108
        %s1110 = sand.u32 %s230, 1
        %s1111 = smul.addr %s1110, 8
        %s1112 = scalar_lea.vmem [#allocation10], %s1111
        // Predicated region
        $region73: #{bnnn_forward_grouped.1} parent=55 // pred_check
          %p1113 = pneg %p240
        $region74: #{bnnn_forward_grouped.1} parent=55 // pred_check_branch
          %1115 = sbr.rel (%p1113) target = $region76
        $region75: #{bnnn_forward_grouped.1} parent=55 // pred_region
          %s1117 = ssub.s32 128, 128
          %1118 = vsyncadd %s1109, %s1117
          %s1119 = smul.addr %s28, 128
          %s1120 = scalar_lea.hbm %s9, %s1119
          %s1122 = sshll.u32 %s1112, 4
          %s1123 = int_to_ptr.vmem [resolvable:$true] %s1122
          %1125 = dma.vmem_to_hbm [thread:$0]  %s1123, 128, %s1120, %s1109
        $region76: #{bnnn_forward_grouped.1} parent=55 // pred_fallthru
          _
      $region56: #{bnnn_forward_grouped.1} parent=5 // pred_fallthru
        _
      %p1126 = scmp.le.s32.totalorder 2, %s23
      // Predicated region
      $region77: #{bnnn_forward_grouped.1} parent=5 // pred_check
        %p1127 = pneg %p1126
      $region78: #{bnnn_forward_grouped.1} parent=5 // pred_check_branch
        %1129 = sbr.rel (%p1127) target = $region80
      $region79: #{bnnn_forward_grouped.1} parent=5 // pred_region
        %s1130 = ssub.s32 %s23, 2
        // Predicated region
        $region81: #{bnnn_forward_grouped.1} parent=79 // pred_check
          %p1131 = pneg %p246
        $region82: #{bnnn_forward_grouped.1} parent=79 // pred_check_branch
          %1133 = sbr.rel (%p1131) target = $region84
        $region83: #{bnnn_forward_grouped.1} parent=79 // pred_region
          %s1134 = sand.u32 %s231, 1
          %s1135 = scalar_lea.sflag [#allocation4], %s1134
          %s1136 = sand.u32 %s231, 1
          %s1137 = smul.addr %s1136, 8
          %s1138 = scalar_lea.vmem [#allocation10], %s1137
          %1139 = dma.done %s1135, 128
        $region84: #{bnnn_forward_grouped.1} parent=79 // pred_fallthru
          _
      $region80: #{bnnn_forward_grouped.1} parent=5 // pred_fallthru
        _
    $region6: #{bnnn_forward_grouped.1} parent=1 // loop_footer
      %s27 = sadd.s32 1, %s23
    $region7: #{bnnn_forward_grouped.1} parent=1 // loop_footer_branch
      %22 = sbr.rel target = $region3
    $region8: #{bnnn_forward_grouped.1} parent=1 // loop_exit
      _
    %1140 = vsyncpa [#allocation3], 1
    %s1141 = scalar_lea.sflag [#allocation3], 1
    %1142 = vsyncpa %s1141, 1
    %1143 = vsyncpa [#allocation6], 1
    %1144 = vsyncpa [#allocation9], 1
    %1145 = vsyncpa [#allocation4], 1
    %s1146 = scalar_lea.sflag [#allocation4], 1
    %1147 = vsyncpa %s1146, 1

</llo_original>
